<compile_context>
chip_gen: v5e
topology: v5e:2x2
jax: 0.10.0
libtpu: 0.0.40
codegen_flags: <defaults>
</compile_context>

<pallas_src>
import functools

import jax
import jax.numpy as jnp
from jax import lax
from jax.experimental import pallas as pl
from jax.experimental.pallas import tpu as pltpu


def _conv_kernel(x_ref, w_ref, o_ref, a_ref, *,
                 n_batch, c_in, kh_k, kw_k, img_w, seg_len):
    """Fused im2col conv, single invocation, one MXU matmul.

    x_ref : (C, N*L_seg + max_off)   flattened spatial input, images laid out
                                     back-to-back on the lane axis with
                                     per-image stride L_seg, zero tail so every
                                     tap slice is in-bounds (VMEM)
    w_ref : (O, KH*KW*C)             weight rows ordered (kh, kw, c)           (VMEM)
    o_ref : (N, O, L_seg)            per-image conv rows; lanes >= OH*W junk   (VMEM)
    a_ref : (KH*KW*C, N*L_seg)       scratch: stacked im2col activation        (VMEM)

    For tap (kh, kw) the window x[n, c, oh+kh, ow+kw] over all (n, oh, ow) is a
    single contiguous lane slice of x_ref starting at off = kh*W + kw, so the
    scratch is built with KH*KW shifted block copies; the convolution is then
    one (O, C*KH*KW) @ (C*KH*KW, N*L_seg) MXU matmul accumulated in f32.
    Lanes corresponding to ow >= OW (and oh*W+ow >= OH*W) are wrap-around
    garbage and are sliced off by the caller.
    """
    width = n_batch * seg_len
    # Build stacked activation: one shifted (C, width) copy per kernel tap.
    for kh in range(kh_k):
        for kw in range(kw_k):
            t = kh * kw_k + kw
            off = kh * img_w + kw
            a_ref[t * c_in:(t + 1) * c_in, :] = x_ref[:, off:off + width]
    # Single MXU matmul over the full contraction (K = C*KH*KW).
    res = jnp.dot(w_ref[...], a_ref[...],
                  preferred_element_type=jnp.float32)          # (O, N*L_seg)
    # Lane-dense, 128-aligned per-image stores.
    for n in range(n_batch):
        o_ref[n] = res[:, n * seg_len:(n + 1) * seg_len].astype(o_ref.dtype)


@functools.partial(jax.jit, static_argnames=("reshape_dims",))
def conv_reshape_model(x, w, reshape_dims=(0, 2, 1, 3)):
    """F.conv2d(x, w, bias=None) followed by permute/transpose(reshape_dims).

    x: (N, C, H, W)   float32 (NCHW, like PyTorch)
    w: (O, C, KH, KW) float32 (OIHW, like PyTorch)
    """
    N, C, H, W = x.shape
    O, C2, KH, KW = w.shape
    assert C == C2
    OH, OW = H - KH + 1, W - KW + 1
    HW = H * W
    OUT_LEN = OH * W                              # valid lanes per image row
    L_seg = ((HW + 127) // 128) * 128             # per-image lane segment (128-dense)
    max_off = (KH - 1) * W + (KW - 1)             # largest tap offset
    X_W = N * L_seg + max_off                     # input lane width (tap slices in-bounds)

    # ---- glue-in (tiny, fuses into a couple of XLA ops):
    #   (N,C,H,W) -> (C,N,HW) -> zero-pad each image segment to L_seg and the
    #   tail by max_off -> (C, X_W).   Weight OIHW -> (O, KH*KW*C), matching
    #   the (tap, channel) row order of the in-kernel stacked activation.
    x_cat = jnp.transpose(x.reshape(N, C, HW), (1, 0, 2))
    x_cat = jnp.pad(x_cat, ((0, 0), (0, 0), (0, L_seg - HW))).reshape(C, N * L_seg)
    x_cat = jnp.pad(x_cat, ((0, 0), (0, max_off)))
    w_mat = jnp.transpose(w, (0, 2, 3, 1)).reshape(O, KH * KW * C)

    kernel = functools.partial(
        _conv_kernel,
        n_batch=N, c_in=C, kh_k=KH, kw_k=KW, img_w=W, seg_len=L_seg)

    out = pl.pallas_call(
        kernel,
        out_shape=jax.ShapeDtypeStruct((N, O, L_seg), x.dtype),
        grid_spec=pltpu.PrefetchScalarGridSpec(
            num_scalar_prefetch=0,
            grid=(1,),                                    # single shot: all in VMEM
            in_specs=[
                pl.BlockSpec((C, X_W), lambda i: (0, 0)),
                pl.BlockSpec((O, KH * KW * C), lambda i: (0, 0)),
            ],
            out_specs=pl.BlockSpec((N, O, L_seg), lambda i: (0, 0, 0)),
            scratch_shapes=[pltpu.VMEM((KH * KW * C, N * L_seg), jnp.float32)],
        ),
        compiler_params=pltpu.CompilerParams(
            dimension_semantics=("arbitrary",)),
    )(x_cat, w_mat)

    # ---- glue-out: drop junk lanes, reshape to (N, O, OH, OW), then the
    # requested permute/transpose; fuses into one small copy (no NCHW detour).
    conv = out[:, :, :OUT_LEN].reshape(N, O, OH, W)[:, :, :, :OW]
    if len(reshape_dims) == 4:
        return jnp.transpose(conv, reshape_dims)          # torch.permute path
    d0, d1 = reshape_dims                                 # torch.transpose path
    return jnp.swapaxes(conv, d0, d1)


def _reference(x, w, reshape_dims=(0, 2, 1, 3)):
    conv = lax.conv_general_dilated(
        x, w, window_strides=(1, 1), padding="VALID",
        dimension_numbers=("NCHW", "OIHW", "NCHW"),
    )
    if len(reshape_dims) == 4:
        return jnp.transpose(conv, reshape_dims)
    return jnp.swapaxes(conv, *reshape_dims)


if __name__ == "__main__":
    key = jax.random.PRNGKey(0)
    kx, kw = jax.random.split(key)

    # Small shapes consistent with the module: batch=2, in_ch=4, spatial=16,
    # out_ch=8, 3x3 kernel.
    x = jax.random.normal(kx, (2, 4, 16, 16), dtype=jnp.float32)
    w = jax.random.normal(kw, (8, 4, 3, 3), dtype=jnp.float32)

    reshape_dims = (0, 2, 1, 3)  # call_function = torch.permute

    out = conv_reshape_model(x, w, reshape_dims=reshape_dims)
    out = jax.block_until_ready(out)

    ref = _reference(x, w, reshape_dims)
    assert out.shape == ref.shape == (2, 14, 8, 14), out.shape
    assert jnp.allclose(out, ref, atol=1e-4, rtol=1e-4), "mismatch vs reference"

    print("KERNEL_OK")
</pallas_src>

<mosaic_0001>
module attributes {stable_mosaic.version = 11 : i64} {
  func.func @_conv_kernel(%arg0: i32, %arg1: memref<4x546xf32, #tpu.memory_space<vmem>>, %arg2: memref<8x36xf32, #tpu.memory_space<vmem>>, %arg3: memref<2x8x256xf32, #tpu.memory_space<vmem>>, %arg4: memref<36x512xf32, #tpu.memory_space<vmem>>) attributes {dimension_semantics = [#tpu.dimension_semantics<arbitrary>], iteration_bounds = array<i64: 1>, scalar_prefetch = 0 : i64, scratch_operands = 1 : i64, tpu.core_type = #tpu.core_type<tc>, window_params = [{pipeline_mode = #tpu.pipeline_mode<synchronous>, transform_indices = @transform_0, window_bounds = array<i64: 4, 546>}, {pipeline_mode = #tpu.pipeline_mode<synchronous>, transform_indices = @transform_1, window_bounds = array<i64: 8, 36>}, {pipeline_mode = #tpu.pipeline_mode<synchronous>, transform_indices = @transform_2, window_bounds = array<i64: 2, 8, 256>}]} {
    %c0 = arith.constant 0 : index
    %c0_0 = arith.constant 0 : index
    %0 = vector.load %arg1[%c0, %c0_0] : memref<4x546xf32, #tpu.memory_space<vmem>>, vector<4x512xf32>
    %c0_1 = arith.constant 0 : index
    %c0_2 = arith.constant 0 : index
    %1 = vector.load %arg4[%c0_1, %c0_2] : memref<36x512xf32, #tpu.memory_space<vmem>>, vector<4x512xf32>
    tpu.vector_store %arg4[%c0_1, %c0_2], %0 {strides = array<i32>} : memref<36x512xf32, #tpu.memory_space<vmem>>, vector<4x512xf32>,
    %c0_3 = arith.constant 0 : index
    %c1 = arith.constant 1 : index
    %2 = vector.load %arg1[%c0_3, %c1] : memref<4x546xf32, #tpu.memory_space<vmem>>, vector<4x512xf32>
    %c4 = arith.constant 4 : index
    %c0_4 = arith.constant 0 : index
    %3 = vector.load %arg4[%c4, %c0_4] : memref<36x512xf32, #tpu.memory_space<vmem>>, vector<4x512xf32>
    tpu.vector_store %arg4[%c4, %c0_4], %2 {strides = array<i32>} : memref<36x512xf32, #tpu.memory_space<vmem>>, vector<4x512xf32>,
    %c0_5 = arith.constant 0 : index
    %c2 = arith.constant 2 : index
    %4 = vector.load %arg1[%c0_5, %c2] : memref<4x546xf32, #tpu.memory_space<vmem>>, vector<4x512xf32>
    %c8 = arith.constant 8 : index
    %c0_6 = arith.constant 0 : index
    %5 = vector.load %arg4[%c8, %c0_6] : memref<36x512xf32, #tpu.memory_space<vmem>>, vector<4x512xf32>
    tpu.vector_store %arg4[%c8, %c0_6], %4 {strides = array<i32>} : memref<36x512xf32, #tpu.memory_space<vmem>>, vector<4x512xf32>,
    %c0_7 = arith.constant 0 : index
    %c16 = arith.constant 16 : index
    %6 = vector.load %arg1[%c0_7, %c16] : memref<4x546xf32, #tpu.memory_space<vmem>>, vector<4x512xf32>
    %c12 = arith.constant 12 : index
    %c0_8 = arith.constant 0 : index
    %7 = vector.load %arg4[%c12, %c0_8] : memref<36x512xf32, #tpu.memory_space<vmem>>, vector<4x512xf32>
    tpu.vector_store %arg4[%c12, %c0_8], %6 {strides = array<i32>} : memref<36x512xf32, #tpu.memory_space<vmem>>, vector<4x512xf32>,
    %c0_9 = arith.constant 0 : index
    %c17 = arith.constant 17 : index
    %8 = vector.load %arg1[%c0_9, %c17] : memref<4x546xf32, #tpu.memory_space<vmem>>, vector<4x512xf32>
    %c16_10 = arith.constant 16 : index
    %c0_11 = arith.constant 0 : index
    %9 = vector.load %arg4[%c16_10, %c0_11] : memref<36x512xf32, #tpu.memory_space<vmem>>, vector<4x512xf32>
    tpu.vector_store %arg4[%c16_10, %c0_11], %8 {strides = array<i32>} : memref<36x512xf32, #tpu.memory_space<vmem>>, vector<4x512xf32>,
    %c0_12 = arith.constant 0 : index
    %c18 = arith.constant 18 : index
    %10 = vector.load %arg1[%c0_12, %c18] : memref<4x546xf32, #tpu.memory_space<vmem>>, vector<4x512xf32>
    %c20 = arith.constant 20 : index
    %c0_13 = arith.constant 0 : index
    %11 = vector.load %arg4[%c20, %c0_13] : memref<36x512xf32, #tpu.memory_space<vmem>>, vector<4x512xf32>
    tpu.vector_store %arg4[%c20, %c0_13], %10 {strides = array<i32>} : memref<36x512xf32, #tpu.memory_space<vmem>>, vector<4x512xf32>,
    %c0_14 = arith.constant 0 : index
    %c32 = arith.constant 32 : index
    %12 = vector.load %arg1[%c0_14, %c32] : memref<4x546xf32, #tpu.memory_space<vmem>>, vector<4x512xf32>
    %c24 = arith.constant 24 : index
    %c0_15 = arith.constant 0 : index
    %13 = vector.load %arg4[%c24, %c0_15] : memref<36x512xf32, #tpu.memory_space<vmem>>, vector<4x512xf32>
    tpu.vector_store %arg4[%c24, %c0_15], %12 {strides = array<i32>} : memref<36x512xf32, #tpu.memory_space<vmem>>, vector<4x512xf32>,
    %c0_16 = arith.constant 0 : index
    %c33 = arith.constant 33 : index
    %14 = vector.load %arg1[%c0_16, %c33] : memref<4x546xf32, #tpu.memory_space<vmem>>, vector<4x512xf32>
    %c28 = arith.constant 28 : index
    %c0_17 = arith.constant 0 : index
    %15 = vector.load %arg4[%c28, %c0_17] : memref<36x512xf32, #tpu.memory_space<vmem>>, vector<4x512xf32>
    tpu.vector_store %arg4[%c28, %c0_17], %14 {strides = array<i32>} : memref<36x512xf32, #tpu.memory_space<vmem>>, vector<4x512xf32>,
    %c0_18 = arith.constant 0 : index
    %c34 = arith.constant 34 : index
    %16 = vector.load %arg1[%c0_18, %c34] : memref<4x546xf32, #tpu.memory_space<vmem>>, vector<4x512xf32>
    %c32_19 = arith.constant 32 : index
    %c0_20 = arith.constant 0 : index
    %17 = vector.load %arg4[%c32_19, %c0_20] : memref<36x512xf32, #tpu.memory_space<vmem>>, vector<4x512xf32>
    tpu.vector_store %arg4[%c32_19, %c0_20], %16 {strides = array<i32>} : memref<36x512xf32, #tpu.memory_space<vmem>>, vector<4x512xf32>,
    %c0_21 = arith.constant 0 : index
    %c0_22 = arith.constant 0 : index
    %18 = vector.load %arg2[%c0_21, %c0_22] : memref<8x36xf32, #tpu.memory_space<vmem>>, vector<8x36xf32>
    %c0_23 = arith.constant 0 : index
    %c0_24 = arith.constant 0 : index
    %19 = vector.load %arg4[%c0_23, %c0_24] : memref<36x512xf32, #tpu.memory_space<vmem>>, vector<36x512xf32>
    %cst = arith.constant dense<0.000000e+00> : vector<8x512xf32>
    %20 = tpu.matmul %18, %19, %cst {dimension_numbers = #tpu.dot_dimension_numbers<[1], [0], [0], [1], [0, 0, 1, 1], [], []>} : vector<8x36xf32>, vector<36x512xf32>, vector<8x512xf32> -> vector<8x512xf32>
    %21 = vector.extract_strided_slice %20 {offsets = [0, 0], sizes = [8, 256], strides = [1, 1]} : vector<8x512xf32> to vector<8x256xf32>
    %c0_25 = arith.constant 0 : index
    %c0_26 = arith.constant 0 : index
    %c0_27 = arith.constant 0 : index
    %22 = vector.load %arg3[%c0_25, %c0_26, %c0_27] : memref<2x8x256xf32, #tpu.memory_space<vmem>>, vector<1x8x256xf32>
    %23 = vector.shape_cast %22 : vector<1x8x256xf32> to vector<8x256xf32>
    %24 = vector.shape_cast %21 : vector<8x256xf32> to vector<1x8x256xf32>
    tpu.vector_store %arg3[%c0_25, %c0_26, %c0_27], %24 {strides = array<i32>} : memref<2x8x256xf32, #tpu.memory_space<vmem>>, vector<1x8x256xf32>,
    %25 = vector.extract_strided_slice %20 {offsets = [0, 256], sizes = [8, 256], strides = [1, 1]} : vector<8x512xf32> to vector<8x256xf32>
    %c1_28 = arith.constant 1 : index
    %c0_29 = arith.constant 0 : index
    %c0_30 = arith.constant 0 : index
    %26 = vector.load %arg3[%c1_28, %c0_29, %c0_30] : memref<2x8x256xf32, #tpu.memory_space<vmem>>, vector<1x8x256xf32>
    %27 = vector.shape_cast %26 : vector<1x8x256xf32> to vector<8x256xf32>
    %28 = vector.shape_cast %25 : vector<8x256xf32> to vector<1x8x256xf32>
    tpu.vector_store %arg3[%c1_28, %c0_29, %c0_30], %28 {strides = array<i32>} : memref<2x8x256xf32, #tpu.memory_space<vmem>>, vector<1x8x256xf32>,
    return
  }
  func.func @transform_0(%arg0: i32) -> (i32, i32) {
    %c0_i32 = arith.constant 0 : i32
    %c0_i32_0 = arith.constant 0 : i32
    %c0_i32_1 = arith.constant 0 : i32
    return %c0_i32, %c0_i32_0 : i32, i32
  }
  func.func @transform_1(%arg0: i32) -> (i32, i32) {
    %c0_i32 = arith.constant 0 : i32
    %c0_i32_0 = arith.constant 0 : i32
    %c0_i32_1 = arith.constant 0 : i32
    return %c0_i32, %c0_i32_0 : i32, i32
  }
  func.func @transform_2(%arg0: i32) -> (i32, i32, i32) {
    %c0_i32 = arith.constant 0 : i32
    %c0_i32_0 = arith.constant 0 : i32
    %c0_i32_1 = arith.constant 0 : i32
    %c0_i32_2 = arith.constant 0 : i32
    return %c0_i32, %c0_i32_0, %c0_i32_1 : i32, i32, i32
  }
}

</mosaic_0001>

<llo_original>
// kernel: conv_reshape_model.1
$region0: #{conv_reshape_model.1}
  #allocation0 [shape = 'u32[]', space=smem, size = 0x4, offset = 0x4, fixed_abs, tag = 'smem constant byte address 0x4 - core index']
  #allocation1 [shape = 'u32[72,128]{1,0:T(1,128)}', space=vmem, size = 0x9000, scoped, tag = 'internal scratch']
  #allocation2 [shape = 'f32[36,512]{1,0:T(8,128)}', space=vmem, size = 0x14000, scoped, tag = 'scratch operand']
  %s0 = inlined_call_operand.vmem [shape: f32[4,546], index: 0, kind: input, shape index: {}]
  %s1 = inlined_call_operand.vmem [shape: f32[8,36], index: 1, kind: input, shape index: {}]
  %s2 = inlined_call_operand.vmem [shape: f32[2,8,256], index: 2, kind: output, shape index: {}]
  %s3 = sld [smem:[#allocation0]]
  $region18: #{conv_reshape_model.1} parent=0
    _
  %s5 = ssub.s32 1, %s3
  %s6 = scalar_select 0, %s5, %s3
  // Predicated region
  $region2: #{conv_reshape_model.1} parent=0 // pred_check
    _
  $region3: #{conv_reshape_model.1} parent=0 // pred_check_branch
    %8 = sbr.rel (0) target = $region5
  $region4: #{conv_reshape_model.1} parent=0 // pred_region
    _
  $region5: #{conv_reshape_model.1} parent=0 // pred_fallthru
    _
  // Predicated region
  $region6: #{conv_reshape_model.1} parent=0 // pred_check
    _
  $region7: #{conv_reshape_model.1} parent=0 // pred_check_branch
    %10 = sbr.rel (0) target = $region9
  $region8: #{conv_reshape_model.1} parent=0 // pred_region
    _
  $region9: #{conv_reshape_model.1} parent=0 // pred_fallthru
    _
  %v11 = vld [vmem:[%s0] sm:$0xff]
  %v12 = vld [vmem:[%s0 + $0x8] sm:$0xff]
  %15 = vst [vmem:[#allocation1] ss:$2 sm:$0xff] %v11
  %s16 = scalar_lea.vmem [#allocation1], 16
  %17 = vst [vmem:[%s16] ss:$2 sm:$0xff] %v12
  %v18 = vld.sshfl [vmem:[#allocation1] sm:$0xff pattern:$0x75316420]
  %v19 = vld.sshfl [vmem:[#allocation1 + $0x8] sm:$0xff pattern:$0x75316420]
  %v20 = vld.sshfl [vmem:[#allocation1 + $0x10] sm:$0xff pattern:$0x75316420]
  %v21 = vld.sshfl [vmem:[#allocation1 + $0x18] sm:$0xff pattern:$0x75316420]
  %26 = vst [vmem:[#allocation2] sm:$0xf] %v18
  %27 = vst [vmem:[#allocation2 + $0x8] sm:$0xf] %v19
  %28 = vst [vmem:[#allocation2 + $0x10] sm:$0xf] %v20
  %29 = vst [vmem:[#allocation2 + $0x18] sm:$0xf] %v21
  %v30 = vld [vmem:[%s0] sm:$0xff]
  %v31 = vld [vmem:[%s0 + $0x8] sm:$0xff]
  %v32 = vld [vmem:[%s0 + $0x10] sm:$0xf]
  %s36 = scalar_lea.vmem [#allocation1], 1
  %37 = vst [vmem:[%s36] ss:$2 sm:$0xff] %v30
  %s38 = scalar_lea.vmem [#allocation1], 17
  %39 = vst [vmem:[%s38] ss:$2 sm:$0xff] %v31
  %s40 = scalar_lea.vmem [#allocation1], 33
  %41 = vst [vmem:[%s40] ss:$2 sm:$0xff] %v32
  %v42 = vld.sshfl [vmem:[#allocation1] sm:$0xff pattern:$0x75316420]
  %v43 = vld.sshfl [vmem:[#allocation1 + $0x8] sm:$0xff pattern:$0x75316420]
  %v44 = vld.sshfl [vmem:[#allocation1 + $0x10] sm:$0xff pattern:$0x75316420]
  %v45 = vld.sshfl [vmem:[#allocation1 + $0x18] sm:$0xff pattern:$0x75316420]
  %v46 = vld.sshfl [vmem:[#allocation1 + $0x20] sm:$0xff pattern:$0x75316420]
  %47 = vrot.lane.b32.xlu0 %v42, 127
  %v48 = vpop.permute.xlu0 %47
  %49 = vrot.lane.b32.xlu0 %v43, 127
  %v50 = vpop.permute.xlu0 %49
  %51 = vrot.lane.b32.xlu0 %v44, 127
  %v52 = vpop.permute.xlu0 %51
  %53 = vrot.lane.b32.xlu0 %v45, 127
  %v54 = vpop.permute.xlu0 %53
  %55 = vrot.lane.b32.xlu0 %v46, 127
  %v56 = vpop.permute.xlu0 %55
  %vm57 = vcmask 1039360
  %v58 = vsel %vm57, %v48, %v50
  %v59 = vsel %vm57, %v50, %v52
  %v60 = vsel %vm57, %v52, %v54
  %v61 = vsel %vm57, %v54, %v56
  %66 = vst [vmem:[#allocation2] sm:$0xf0] %v58
  %67 = vst [vmem:[#allocation2 + $0x8] sm:$0xf0] %v59
  %68 = vst [vmem:[#allocation2 + $0x10] sm:$0xf0] %v60
  %69 = vst [vmem:[#allocation2 + $0x18] sm:$0xf0] %v61
  %v70 = vld [vmem:[%s0] sm:$0xff]
  %v71 = vld [vmem:[%s0 + $0x8] sm:$0xff]
  %v72 = vld [vmem:[%s0 + $0x10] sm:$0xf]
  %76 = vst [vmem:[#allocation1] ss:$2 sm:$0xff] %v70
  %s77 = scalar_lea.vmem [#allocation1], 16
  %78 = vst [vmem:[%s77] ss:$2 sm:$0xff] %v71
  %s79 = scalar_lea.vmem [#allocation1], 32
  %80 = vst [vmem:[%s79] ss:$2 sm:$0xff] %v72
  %v81 = vld.sshfl [vmem:[#allocation1] sm:$0xff pattern:$0x75316420]
  %v82 = vld.sshfl [vmem:[#allocation1 + $0x8] sm:$0xff pattern:$0x75316420]
  %v83 = vld.sshfl [vmem:[#allocation1 + $0x10] sm:$0xff pattern:$0x75316420]
  %v84 = vld.sshfl [vmem:[#allocation1 + $0x18] sm:$0xff pattern:$0x75316420]
  %v85 = vld.sshfl [vmem:[#allocation1 + $0x20] sm:$0xff pattern:$0x75316420]
  %86 = vrot.lane.b32.xlu0 %v81, 126
  %v87 = vpop.permute.xlu0 %86
  %88 = vrot.lane.b32.xlu0 %v82, 126
  %v89 = vpop.permute.xlu0 %88
  %90 = vrot.lane.b32.xlu0 %v83, 126
  %v91 = vpop.permute.xlu0 %90
  %92 = vrot.lane.b32.xlu0 %v84, 126
  %v93 = vpop.permute.xlu0 %92
  %94 = vrot.lane.b32.xlu0 %v85, 126
  %v95 = vpop.permute.xlu0 %94
  %vm96 = vcmask 1031168
  %v97 = vsel %vm96, %v87, %v89
  %v98 = vsel %vm96, %v89, %v91
  %v99 = vsel %vm96, %v91, %v93
  %v100 = vsel %vm96, %v93, %v95
  %105 = vst [vmem:[#allocation2 + $0x20] sm:$0xf] %v97
  %106 = vst [vmem:[#allocation2 + $0x28] sm:$0xf] %v98
  %107 = vst [vmem:[#allocation2 + $0x30] sm:$0xf] %v99
  %108 = vst [vmem:[#allocation2 + $0x38] sm:$0xf] %v100
  %v109 = vld [vmem:[%s0] sm:$0xff]
  %v110 = vld [vmem:[%s0 + $0x8] sm:$0xff]
  %v111 = vld [vmem:[%s0 + $0x10] sm:$0xf]
  %s115 = scalar_lea.vmem [#allocation1], 1
  %116 = vst [vmem:[%s115] ss:$2 sm:$0xff] %v109
  %s117 = scalar_lea.vmem [#allocation1], 17
  %118 = vst [vmem:[%s117] ss:$2 sm:$0xff] %v110
  %s119 = scalar_lea.vmem [#allocation1], 33
  %120 = vst [vmem:[%s119] ss:$2 sm:$0xff] %v111
  %v121 = vld.sshfl [vmem:[#allocation1] sm:$0xff pattern:$0x75316420]
  %v122 = vld.sshfl [vmem:[#allocation1 + $0x8] sm:$0xff pattern:$0x75316420]
  %v123 = vld.sshfl [vmem:[#allocation1 + $0x10] sm:$0xff pattern:$0x75316420]
  %v124 = vld.sshfl [vmem:[#allocation1 + $0x18] sm:$0xff pattern:$0x75316420]
  %v125 = vld.sshfl [vmem:[#allocation1 + $0x20] sm:$0xff pattern:$0x75316420]
  %126 = vrot.lane.b32.xlu0 %v121, 112
  %v127 = vpop.permute.xlu0 %126
  %128 = vrot.lane.b32.xlu0 %v122, 112
  %v129 = vpop.permute.xlu0 %128
  %130 = vrot.lane.b32.xlu0 %v123, 112
  %v131 = vpop.permute.xlu0 %130
  %132 = vrot.lane.b32.xlu0 %v124, 112
  %v133 = vpop.permute.xlu0 %132
  %134 = vrot.lane.b32.xlu0 %v125, 112
  %v135 = vpop.permute.xlu0 %134
  %vm136 = vcmask 916480
  %v137 = vsel %vm136, %v127, %v129
  %v138 = vsel %vm136, %v129, %v131
  %v139 = vsel %vm136, %v131, %v133
  %v140 = vsel %vm136, %v133, %v135
  %145 = vst [vmem:[#allocation2 + $0x20] sm:$0xf0] %v137
  %146 = vst [vmem:[#allocation2 + $0x28] sm:$0xf0] %v138
  %147 = vst [vmem:[#allocation2 + $0x30] sm:$0xf0] %v139
  %148 = vst [vmem:[#allocation2 + $0x38] sm:$0xf0] %v140
  %v149 = vld [vmem:[%s0] sm:$0xff]
  %v150 = vld [vmem:[%s0 + $0x8] sm:$0xff]
  %v151 = vld [vmem:[%s0 + $0x10] sm:$0xf]
  %155 = vst [vmem:[#allocation1] ss:$2 sm:$0xff] %v149
  %s156 = scalar_lea.vmem [#allocation1], 16
  %157 = vst [vmem:[%s156] ss:$2 sm:$0xff] %v150
  %s158 = scalar_lea.vmem [#allocation1], 32
  %159 = vst [vmem:[%s158] ss:$2 sm:$0xff] %v151
  %v160 = vld.sshfl [vmem:[#allocation1] sm:$0xff pattern:$0x75316420]
  %v161 = vld.sshfl [vmem:[#allocation1 + $0x8] sm:$0xff pattern:$0x75316420]
  %v162 = vld.sshfl [vmem:[#allocation1 + $0x10] sm:$0xff pattern:$0x75316420]
  %v163 = vld.sshfl [vmem:[#allocation1 + $0x18] sm:$0xff pattern:$0x75316420]
  %v164 = vld.sshfl [vmem:[#allocation1 + $0x20] sm:$0xff pattern:$0x75316420]
  %165 = vrot.lane.b32.xlu0 %v160, 111
  %v166 = vpop.permute.xlu0 %165
  %167 = vrot.lane.b32.xlu0 %v161, 111
  %v168 = vpop.permute.xlu0 %167
  %169 = vrot.lane.b32.xlu0 %v162, 111
  %v170 = vpop.permute.xlu0 %169
  %171 = vrot.lane.b32.xlu0 %v163, 111
  %v172 = vpop.permute.xlu0 %171
  %173 = vrot.lane.b32.xlu0 %v164, 111
  %v174 = vpop.permute.xlu0 %173
  %vm175 = vcmask 908288
  %v176 = vsel %vm175, %v166, %v168
  %v177 = vsel %vm175, %v168, %v170
  %v178 = vsel %vm175, %v170, %v172
  %v179 = vsel %vm175, %v172, %v174
  %184 = vst [vmem:[#allocation2 + $0x40] sm:$0xf] %v176
  %185 = vst [vmem:[#allocation2 + $0x48] sm:$0xf] %v177
  %186 = vst [vmem:[#allocation2 + $0x50] sm:$0xf] %v178
  %187 = vst [vmem:[#allocation2 + $0x58] sm:$0xf] %v179
  %v188 = vld [vmem:[%s0] sm:$0xff]
  %v189 = vld [vmem:[%s0 + $0x8] sm:$0xff]
  %v190 = vld [vmem:[%s0 + $0x10] sm:$0xf]
  %s194 = scalar_lea.vmem [#allocation1], 1
  %195 = vst [vmem:[%s194] ss:$2 sm:$0xff] %v188
  %s196 = scalar_lea.vmem [#allocation1], 17
  %197 = vst [vmem:[%s196] ss:$2 sm:$0xff] %v189
  %s198 = scalar_lea.vmem [#allocation1], 33
  %199 = vst [vmem:[%s198] ss:$2 sm:$0xff] %v190
  %v200 = vld.sshfl [vmem:[#allocation1] sm:$0xff pattern:$0x75316420]
  %v201 = vld.sshfl [vmem:[#allocation1 + $0x8] sm:$0xff pattern:$0x75316420]
  %v202 = vld.sshfl [vmem:[#allocation1 + $0x10] sm:$0xff pattern:$0x75316420]
  %v203 = vld.sshfl [vmem:[#allocation1 + $0x18] sm:$0xff pattern:$0x75316420]
  %v204 = vld.sshfl [vmem:[#allocation1 + $0x20] sm:$0xff pattern:$0x75316420]
  %205 = vrot.lane.b32.xlu0 %v200, 110
  %v206 = vpop.permute.xlu0 %205
  %207 = vrot.lane.b32.xlu0 %v201, 110
  %v208 = vpop.permute.xlu0 %207
  %209 = vrot.lane.b32.xlu0 %v202, 110
  %v210 = vpop.permute.xlu0 %209
  %211 = vrot.lane.b32.xlu0 %v203, 110
  %v212 = vpop.permute.xlu0 %211
  %213 = vrot.lane.b32.xlu0 %v204, 110
  %v214 = vpop.permute.xlu0 %213
  %vm215 = vcmask 900096
  %v216 = vsel %vm215, %v206, %v208
  %v217 = vsel %vm215, %v208, %v210
  %v218 = vsel %vm215, %v210, %v212
  %v219 = vsel %vm215, %v212, %v214
  %224 = vst [vmem:[#allocation2 + $0x40] sm:$0xf0] %v216
  %225 = vst [vmem:[#allocation2 + $0x48] sm:$0xf0] %v217
  %226 = vst [vmem:[#allocation2 + $0x50] sm:$0xf0] %v218
  %227 = vst [vmem:[#allocation2 + $0x58] sm:$0xf0] %v219
  %v228 = vld [vmem:[%s0] sm:$0xff]
  %v229 = vld [vmem:[%s0 + $0x8] sm:$0xff]
  %v230 = vld [vmem:[%s0 + $0x10] sm:$0xf]
  %234 = vst [vmem:[#allocation1] ss:$2 sm:$0xff] %v228
  %s235 = scalar_lea.vmem [#allocation1], 16
  %236 = vst [vmem:[%s235] ss:$2 sm:$0xff] %v229
  %s237 = scalar_lea.vmem [#allocation1], 32
  %238 = vst [vmem:[%s237] ss:$2 sm:$0xff] %v230
  %v239 = vld.sshfl [vmem:[#allocation1] sm:$0xff pattern:$0x75316420]
  %v240 = vld.sshfl [vmem:[#allocation1 + $0x8] sm:$0xff pattern:$0x75316420]
  %v241 = vld.sshfl [vmem:[#allocation1 + $0x10] sm:$0xff pattern:$0x75316420]
  %v242 = vld.sshfl [vmem:[#allocation1 + $0x18] sm:$0xff pattern:$0x75316420]
  %v243 = vld.sshfl [vmem:[#allocation1 + $0x20] sm:$0xff pattern:$0x75316420]
  %244 = vrot.lane.b32.xlu0 %v239, 96
  %v245 = vpop.permute.xlu0 %244
  %246 = vrot.lane.b32.xlu0 %v240, 96
  %v247 = vpop.permute.xlu0 %246
  %248 = vrot.lane.b32.xlu0 %v241, 96
  %v249 = vpop.permute.xlu0 %248
  %250 = vrot.lane.b32.xlu0 %v242, 96
  %v251 = vpop.permute.xlu0 %250
  %252 = vrot.lane.b32.xlu0 %v243, 96
  %v253 = vpop.permute.xlu0 %252
  %vm254 = vcmask 785408
  %v255 = vsel %vm254, %v245, %v247
  %v256 = vsel %vm254, %v247, %v249
  %v257 = vsel %vm254, %v249, %v251
  %v258 = vsel %vm254, %v251, %v253
  %263 = vst [vmem:[#allocation2 + $0x60] sm:$0xf] %v255
  %264 = vst [vmem:[#allocation2 + $0x68] sm:$0xf] %v256
  %265 = vst [vmem:[#allocation2 + $0x70] sm:$0xf] %v257
  %266 = vst [vmem:[#allocation2 + $0x78] sm:$0xf] %v258
  %v267 = vld [vmem:[%s0] sm:$0xff]
  %v268 = vld [vmem:[%s0 + $0x8] sm:$0xff]
  %v269 = vld [vmem:[%s0 + $0x10] sm:$0xf]
  %s273 = scalar_lea.vmem [#allocation1], 1
  %274 = vst [vmem:[%s273] ss:$2 sm:$0xff] %v267
  %s275 = scalar_lea.vmem [#allocation1], 17
  %276 = vst [vmem:[%s275] ss:$2 sm:$0xff] %v268
  %s277 = scalar_lea.vmem [#allocation1], 33
  %278 = vst [vmem:[%s277] ss:$2 sm:$0xff] %v269
  %v279 = vld.sshfl [vmem:[#allocation1] sm:$0xff pattern:$0x75316420]
  %v280 = vld.sshfl [vmem:[#allocation1 + $0x8] sm:$0xff pattern:$0x75316420]
  %v281 = vld.sshfl [vmem:[#allocation1 + $0x10] sm:$0xff pattern:$0x75316420]
  %v282 = vld.sshfl [vmem:[#allocation1 + $0x18] sm:$0xff pattern:$0x75316420]
  %v283 = vld.sshfl [vmem:[#allocation1 + $0x20] sm:$0xff pattern:$0x75316420]
  %284 = vrot.lane.b32.xlu0 %v279, 95
  %v285 = vpop.permute.xlu0 %284
  %286 = vrot.lane.b32.xlu0 %v280, 95
  %v287 = vpop.permute.xlu0 %286
  %288 = vrot.lane.b32.xlu0 %v281, 95
  %v289 = vpop.permute.xlu0 %288
  %290 = vrot.lane.b32.xlu0 %v282, 95
  %v291 = vpop.permute.xlu0 %290
  %292 = vrot.lane.b32.xlu0 %v283, 95
  %v293 = vpop.permute.xlu0 %292
  %vm294 = vcmask 777216
  %v295 = vsel %vm294, %v285, %v287
  %v296 = vsel %vm294, %v287, %v289
  %v297 = vsel %vm294, %v289, %v291
  %v298 = vsel %vm294, %v291, %v293
  %303 = vst [vmem:[#allocation2 + $0x60] sm:$0xf0] %v295
  %304 = vst [vmem:[#allocation2 + $0x68] sm:$0xf0] %v296
  %305 = vst [vmem:[#allocation2 + $0x70] sm:$0xf0] %v297
  %306 = vst [vmem:[#allocation2 + $0x78] sm:$0xf0] %v298
  %v307 = vld [vmem:[%s0] sm:$0xff]
  %v308 = vld [vmem:[%s0 + $0x8] sm:$0xff]
  %v309 = vld [vmem:[%s0 + $0x10] sm:$0xf]
  %313 = vst [vmem:[#allocation1] ss:$2 sm:$0xff] %v307
  %s314 = scalar_lea.vmem [#allocation1], 16
  %315 = vst [vmem:[%s314] ss:$2 sm:$0xff] %v308
  %s316 = scalar_lea.vmem [#allocation1], 32
  %317 = vst [vmem:[%s316] ss:$2 sm:$0xff] %v309
  %v318 = vld.sshfl [vmem:[#allocation1] sm:$0xff pattern:$0x75316420]
  %v319 = vld.sshfl [vmem:[#allocation1 + $0x8] sm:$0xff pattern:$0x75316420]
  %v320 = vld.sshfl [vmem:[#allocation1 + $0x10] sm:$0xff pattern:$0x75316420]
  %v321 = vld.sshfl [vmem:[#allocation1 + $0x18] sm:$0xff pattern:$0x75316420]
  %v322 = vld.sshfl [vmem:[#allocation1 + $0x20] sm:$0xff pattern:$0x75316420]
  %323 = vrot.lane.b32.xlu0 %v318, 94
  %v324 = vpop.permute.xlu0 %323
  %325 = vrot.lane.b32.xlu0 %v319, 94
  %v326 = vpop.permute.xlu0 %325
  %327 = vrot.lane.b32.xlu0 %v320, 94
  %v328 = vpop.permute.xlu0 %327
  %329 = vrot.lane.b32.xlu0 %v321, 94
  %v330 = vpop.permute.xlu0 %329
  %331 = vrot.lane.b32.xlu0 %v322, 94
  %v332 = vpop.permute.xlu0 %331
  %vm333 = vcmask 769024
  %v334 = vsel %vm333, %v324, %v326
  %v335 = vsel %vm333, %v326, %v328
  %v336 = vsel %vm333, %v328, %v330
  %v337 = vsel %vm333, %v330, %v332
  %342 = vst [vmem:[#allocation2 + $0x80] sm:$0xf] %v334
  %343 = vst [vmem:[#allocation2 + $0x88] sm:$0xf] %v335
  %344 = vst [vmem:[#allocation2 + $0x90] sm:$0xf] %v336
  %345 = vst [vmem:[#allocation2 + $0x98] sm:$0xf] %v337
  %v346 = vld [vmem:[%s1] sm:$0xff]
  %v347 = vld [vmem:[#allocation2] sm:$0xff]
  %v348 = vld [vmem:[#allocation2 + $0x8] sm:$0xff]
  %v349 = vld [vmem:[#allocation2 + $0x10] sm:$0xff]
  %v350 = vld [vmem:[#allocation2 + $0x18] sm:$0xff]
  %v351 = vld [vmem:[#allocation2 + $0x20] sm:$0xff]
  %v352 = vld [vmem:[#allocation2 + $0x28] sm:$0xff]
  %v353 = vld [vmem:[#allocation2 + $0x30] sm:$0xff]
  %v354 = vld [vmem:[#allocation2 + $0x38] sm:$0xff]
  %v355 = vld [vmem:[#allocation2 + $0x40] sm:$0xff]
  %v356 = vld [vmem:[#allocation2 + $0x48] sm:$0xff]
  %v357 = vld [vmem:[#allocation2 + $0x50] sm:$0xff]
  %v358 = vld [vmem:[#allocation2 + $0x58] sm:$0xff]
  %v359 = vld [vmem:[#allocation2 + $0x60] sm:$0xff]
  %v360 = vld [vmem:[#allocation2 + $0x68] sm:$0xff]
  %v361 = vld [vmem:[#allocation2 + $0x70] sm:$0xff]
  %v362 = vld [vmem:[#allocation2 + $0x78] sm:$0xff]
  %v363 = vld [vmem:[#allocation2 + $0x80] sm:$0xf]
  %v364 = vld [vmem:[#allocation2 + $0x88] sm:$0xf]
  %v365 = vld [vmem:[#allocation2 + $0x90] sm:$0xf]
  %v366 = vld [vmem:[#allocation2 + $0x98] sm:$0xf]
  %vm367 = vcmask 293888
  %v369 = vsel %vm367, %v346, 0
  %vm371 = vcmask 1043456
  %v373 = vsel %vm371, %v363, 0
  %v376 = vsel %vm371, %v364, 0
  %v379 = vsel %vm371, %v365, 0
  %v382 = vsel %vm371, %v366, 0
  %384 = vmatpush.msra.mxu0 0.0
  %385 = vmatpush.msra.mxu0 0.0
  %386 = vmatpush.msra.mxu0 0.0
  %387 = vmatpush.msra.mxu0 0.0
  %388 = vmatpush.msra.mxu0 0.0
  %389 = vmatpush.msra.mxu0 0.0
  %390 = vmatpush.msra.mxu0 0.0
  %391 = vmatpush.msra.mxu0 0.0
  %392 = vmatpush.msra.mxu0 0.0
  %393 = vmatpush.msra.mxu0 0.0
  %394 = vmatpush.msra.mxu0 0.0
  %395 = vmatpush.msra.mxu0 %v373
  %396 = vmatpush.msra.mxu0 %v359
  %397 = vmatpush.msra.mxu0 %v355
  %398 = vmatpush.msra.mxu0 %v351
  %399 = vmatpush.msra.mxu0 %v347
  %400 = vmatmul.f32.gmra.mxu0 %v369
  %v401 = vpop.f32.mrf.mxu0
  %v402 = vadd.f32 0.0, %v401
  %403 = vdwg.mxu0
  %404 = vmatpush.msra.mxu0 0.0
  %405 = vmatpush.msra.mxu0 0.0
  %406 = vmatpush.msra.mxu0 0.0
  %407 = vmatpush.msra.mxu0 0.0
  %408 = vmatpush.msra.mxu0 0.0
  %409 = vmatpush.msra.mxu0 0.0
  %410 = vmatpush.msra.mxu0 0.0
  %411 = vmatpush.msra.mxu0 0.0
  %412 = vmatpush.msra.mxu0 0.0
  %413 = vmatpush.msra.mxu0 0.0
  %414 = vmatpush.msra.mxu0 0.0
  %415 = vmatpush.msra.mxu0 %v376
  %416 = vmatpush.msra.mxu0 %v360
  %417 = vmatpush.msra.mxu0 %v356
  %418 = vmatpush.msra.mxu0 %v352
  %419 = vmatpush.msra.mxu0 %v348
  %420 = vmatmul.f32.gmra.mxu0 %v369
  %v421 = vpop.f32.mrf.mxu0
  %v422 = vadd.f32 0.0, %v421
  %423 = vdwg.mxu0
  %424 = vmatpush.msra.mxu0 0.0
  %425 = vmatpush.msra.mxu0 0.0
  %426 = vmatpush.msra.mxu0 0.0
  %427 = vmatpush.msra.mxu0 0.0
  %428 = vmatpush.msra.mxu0 0.0
  %429 = vmatpush.msra.mxu0 0.0
  %430 = vmatpush.msra.mxu0 0.0
  %431 = vmatpush.msra.mxu0 0.0
  %432 = vmatpush.msra.mxu0 0.0
  %433 = vmatpush.msra.mxu0 0.0
  %434 = vmatpush.msra.mxu0 0.0
  %435 = vmatpush.msra.mxu0 %v379
  %436 = vmatpush.msra.mxu0 %v361
  %437 = vmatpush.msra.mxu0 %v357
  %438 = vmatpush.msra.mxu0 %v353
  %439 = vmatpush.msra.mxu0 %v349
  %440 = vmatmul.f32.gmra.mxu0 %v369
  %v441 = vpop.f32.mrf.mxu0
  %v442 = vadd.f32 0.0, %v441
  %443 = vdwg.mxu0
  %444 = vmatpush.msra.mxu0 0.0
  %445 = vmatpush.msra.mxu0 0.0
  %446 = vmatpush.msra.mxu0 0.0
  %447 = vmatpush.msra.mxu0 0.0
  %448 = vmatpush.msra.mxu0 0.0
  %449 = vmatpush.msra.mxu0 0.0
  %450 = vmatpush.msra.mxu0 0.0
  %451 = vmatpush.msra.mxu0 0.0
  %452 = vmatpush.msra.mxu0 0.0
  %453 = vmatpush.msra.mxu0 0.0
  %454 = vmatpush.msra.mxu0 0.0
  %455 = vmatpush.msra.mxu0 %v382
  %456 = vmatpush.msra.mxu0 %v362
  %457 = vmatpush.msra.mxu0 %v358
  %458 = vmatpush.msra.mxu0 %v354
  %459 = vmatpush.msra.mxu0 %v350
  %460 = vmatmul.f32.gmra.mxu0 %v369
  %v461 = vpop.f32.mrf.mxu0
  %v462 = vadd.f32 0.0, %v461
  %463 = vdwg.mxu0
  %464 = vst [vmem:[%s2] sm:$0xff] %v402
  %465 = vst [vmem:[%s2 + $0x8] sm:$0xff] %v422
  %s466 = scalar_lea.vmem %s2, 16
  %467 = vst [vmem:[%s466] sm:$0xff] %v442
  %468 = vst [vmem:[%s466 + $0x8] sm:$0xff] %v462
  // Predicated region
  $region10: #{conv_reshape_model.1} parent=0 // pred_check
    _
  $region11: #{conv_reshape_model.1} parent=0 // pred_check_branch
    %470 = sbr.rel (0) target = $region13
  $region12: #{conv_reshape_model.1} parent=0 // pred_region
    _
  $region13: #{conv_reshape_model.1} parent=0 // pred_fallthru
    _
  // Predicated region
  $region14: #{conv_reshape_model.1} parent=0 // pred_check
    _
  $region15: #{conv_reshape_model.1} parent=0 // pred_check_branch
    %472 = sbr.rel (0) target = $region17
  $region16: #{conv_reshape_model.1} parent=0 // pred_region
    _
  $region17: #{conv_reshape_model.1} parent=0 // pred_fallthru
    _

</llo_original>
